<compile_context>
chip_gen: v6e
topology: v6e:2x2x1
jax: 0.10.0
libtpu: 0.0.40
codegen_flags: <defaults>
</compile_context>

<pallas_src>
import jax
import jax.numpy as jnp
from jax.experimental import pallas as pl
from jax.experimental.pallas import tpu as pltpu

_LANE = 128
_BLOCK_ROWS = 8192  # 8192 * 128 * 4B = 4 MiB per f32 block


def _sigmoid_range_kernel(params_ref, x_ref, o_ref):
    # params_ref is a (2,) f32 array in SMEM: [0.5*(high-low), 0.5*(high+low)].
    a = params_ref[0]
    b = params_ref[1]
    # f32 compute for accuracy on all generations (kernel stays HBM-bound).
    x = x_ref[...].astype(jnp.float32)
    # sigmoid(x)*(high-low)+low == a*tanh(x/2) + b : one EUP transcendental.
    o_ref[...] = (a * jnp.tanh(x * 0.5) + b).astype(o_ref.dtype)


def _choose_block_rows(rows, block_rows):
    """Pick a row-block: big for DMA efficiency, but >= ~4 grid steps for v7x."""
    if rows <= 8:
        return rows  # full-extent block (always legal)
    target = -(-rows // 4)              # cdiv(rows, 4): aim for >= 4 grid steps
    target = ((target + 7) // 8) * 8    # round up to a sublane multiple
    return max(8, min(block_rows, target))


def _sigmoid_range_2d(x2d, params):
    """Run the kernel on a 2-D slab. Tiled when lane-dense, full-extent otherwise."""
    rows, lanes = x2d.shape
    br = _choose_block_rows(rows, _BLOCK_ROWS) if lanes == _LANE else rows
    grid = (pl.cdiv(rows, br),)
    n = rows * lanes
    itemsize = jnp.dtype(x2d.dtype).itemsize
    return pl.pallas_call(
        _sigmoid_range_kernel,
        out_shape=jax.ShapeDtypeStruct((rows, lanes), x2d.dtype),
        grid_spec=pltpu.PrefetchScalarGridSpec(
            num_scalar_prefetch=0,
            grid=grid,
            in_specs=[
                pl.BlockSpec(memory_space=pltpu.MemorySpace.SMEM),  # [a, b]
                pl.BlockSpec((br, lanes), lambda i: (i, 0)),
            ],
            out_specs=pl.BlockSpec((br, lanes), lambda i: (i, 0)),
        ),
        compiler_params=pltpu.CompilerParams(
            dimension_semantics=("parallel",),
            vmem_limit_bytes=32 * 1024 * 1024,  # safe headroom on v5e/v6e/v7x
        ),
        cost_estimate=pl.CostEstimate(
            flops=3 * n, transcendentals=n, bytes_accessed=2 * n * itemsize),
    )(params, x2d)


def sigmoid_range(x, low, high):
    """sigmoid(x) * (high - low) + low, elementwise, via a Pallas TPU kernel."""
    orig_shape = x.shape
    n = x.size

    low_f = jnp.asarray(low, jnp.float32)
    high_f = jnp.asarray(high, jnp.float32)
    params = jnp.stack([(high_f - low_f) * 0.5, (high_f + low_f) * 0.5])

    flat = x.reshape(-1)
    aligned = (n // _LANE) * _LANE
    tail_len = n - aligned

    pieces = []
    if aligned:
        main_src = flat if tail_len == 0 else flat[:aligned]
        main = _sigmoid_range_2d(main_src.reshape(aligned // _LANE, _LANE), params)
        pieces.append(main.reshape(-1))
    if tail_len:
        tail = _sigmoid_range_2d(flat[aligned:].reshape(1, tail_len), params)
        pieces.append(tail.reshape(-1))

    out_flat = pieces[0] if len(pieces) == 1 else jnp.concatenate(pieces)
    return out_flat.reshape(orig_shape)


if __name__ == "__main__":
    key = jax.random.PRNGKey(0)
    low, high = 0.5, 5.5  # module "parameters" from __init__

    # Main NCHW-like input (lane-aligned fast path: no padding, no extra copies).
    x = jax.random.normal(key, (2, 4, 16, 16), dtype=jnp.float32)
    out = sigmoid_range(x, low, high)
    jax.block_until_ready(out)
    ref = jax.nn.sigmoid(x) * (high - low) + low
    assert out.shape == x.shape and out.dtype == x.dtype
    assert jnp.allclose(out, ref, atol=1e-5, rtol=1e-5)

    # Shape NOT a multiple of 128 and smaller than one lane row (tail-only path).
    x2 = jax.random.normal(jax.random.PRNGKey(1), (3, 5, 7), dtype=jnp.float32)
    out2 = sigmoid_range(x2, low, high)
    jax.block_until_ready(out2)
    ref2 = jax.nn.sigmoid(x2) * (high - low) + low
    assert out2.shape == x2.shape and out2.dtype == x2.dtype
    assert jnp.allclose(out2, ref2, atol=1e-5, rtol=1e-5)

    # Misaligned shape larger than 128 (aligned prefix + tail path).
    x3 = jax.random.normal(jax.random.PRNGKey(2), (5, 37), dtype=jnp.float32)
    out3 = sigmoid_range(x3, low, high)
    jax.block_until_ready(out3)
    ref3 = jax.nn.sigmoid(x3) * (high - low) + low
    assert out3.shape == x3.shape and out3.dtype == x3.dtype
    assert jnp.allclose(out3, ref3, atol=1e-5, rtol=1e-5)

    print("KERNEL_OK")
</pallas_src>

<mosaic_0001>
module attributes {stable_mosaic.version = 11 : i64} {
  func.func @_sigmoid_range_kernel(%arg0: i32, %arg1: memref<2xf32, #tpu.memory_space<smem>>, %arg2: memref<8x128xf32, #tpu.memory_space<vmem>>, %arg3: memref<8x128xf32, #tpu.memory_space<vmem>>) attributes {dimension_semantics = [#tpu.dimension_semantics<parallel>], iteration_bounds = array<i64: 2>, scalar_prefetch = 0 : i64, scratch_operands = 0 : i64, tpu.core_type = #tpu.core_type<tc>, window_params = [{transform_indices = @transform_0, window_bounds = array<i64: 2>}, {transform_indices = @transform_1, window_bounds = array<i64: 8, 128>}, {transform_indices = @transform_2, window_bounds = array<i64: 8, 128>}]} {
    %c0 = arith.constant 0 : index
    %0 = memref.load %arg1[%c0] : memref<2xf32, #tpu.memory_space<smem>>
    %c1 = arith.constant 1 : index
    %1 = memref.load %arg1[%c1] : memref<2xf32, #tpu.memory_space<smem>>
    %c0_0 = arith.constant 0 : index
    %c0_1 = arith.constant 0 : index
    %2 = vector.load %arg2[%c0_0, %c0_1] : memref<8x128xf32, #tpu.memory_space<vmem>>, vector<8x128xf32>
    %cst = arith.constant 5.000000e-01 : f32
    %3 = vector.broadcast %cst : f32 to vector<8x128xf32>
    %4 = arith.mulf %2, %3 : vector<8x128xf32>
    %5 = math.tanh %4 : vector<8x128xf32>
    %6 = vector.broadcast %0 : f32 to vector<8x128xf32>
    %7 = arith.mulf %6, %5 : vector<8x128xf32>
    %8 = vector.broadcast %1 : f32 to vector<8x128xf32>
    %9 = arith.addf %7, %8 : vector<8x128xf32>
    %c0_2 = arith.constant 0 : index
    %c0_3 = arith.constant 0 : index
    %10 = vector.load %arg3[%c0_2, %c0_3] : memref<8x128xf32, #tpu.memory_space<vmem>>, vector<8x128xf32>
    tpu.vector_store %arg3[%c0_2, %c0_3], %9 {strides = array<i32>} : memref<8x128xf32, #tpu.memory_space<vmem>>, vector<8x128xf32>,
    return
  }
  func.func @transform_0(%arg0: i32) -> i32 {
    %c0_i32 = arith.constant 0 : i32
    %c0_i32_0 = arith.constant 0 : i32
    return %c0_i32 : i32
  }
  func.func @transform_1(%arg0: i32) -> (i32, i32) {
    %c0_i32 = arith.constant 0 : i32
    %c0_i32_0 = arith.constant 0 : i32
    return %arg0, %c0_i32 : i32, i32
  }
  func.func @transform_2(%arg0: i32) -> (i32, i32) {
    %c0_i32 = arith.constant 0 : i32
    %c0_i32_0 = arith.constant 0 : i32
    return %arg0, %c0_i32 : i32, i32
  }
}

</mosaic_0001>

<llo_original>
// kernel: tpu_custom_call.1
$region0: #{tpu_custom_call.1}
  #allocation0 [shape = 'u32[]', space=smem, size = 0x4, offset = 0x4, fixed_abs, tag = 'smem constant byte address 0x4 - core index']
  #allocation1 [shape = 'u32[144,128]{1,0:T(1,128)}', space=vmem, size = 0x12000, scoped, tag = 'internal scratch']
  %s0 = inlined_call_operand.hbm [shape: f32[2], index: 0, kind: input, shape index: {}]
  %s1 = inlined_call_operand.hbm [shape: f32[16,128], index: 1, kind: input, shape index: {}]
  %s2 = inlined_call_operand.hbm [shape: f32[16,128], index: 2, kind: output, shape index: {}]
  %s3 = sld [smem:[#allocation0]]
  $region49: #{tpu_custom_call.1} parent=0
    _
  %s5 = ssub.s32 1, %s3
  %s6 = scalar_select 0, %s5, %s3
  $region1: #{tpu_custom_call.1} parent=0
    #allocation2 [shape = 'u8[512]{0}', space=smem, size = 0x200, scoped, tag = 'input window, operand 0, single buffered']
    #allocation3 [shape = 's32[2]{0}', space=sflag, size = 0x8, scoped, tag = 'scoped memory for tpu_custom_call.1']
    #allocation4 [shape = 's32[2]{0}', space=sflag, size = 0x8, scoped, tag = 'scoped memory for tpu_custom_call.1']
    #allocation5 [shape = 's32[2]{0}', space=sflag, size = 0x8, scoped, tag = 'scoped memory for tpu_custom_call.1']
    #allocation6 [shape = 'u8[8192]{0}', space=vmem, size = 0x2000, scoped, tag = 'input window, operand 1']
    #allocation7 [shape = 'u8[8192]{0}', space=vmem, size = 0x2000, scoped, tag = 'output window, operand 0']
    %7 = vsyncpa [#allocation5], 0
    %8 = vsyncpa [#allocation3], 0
    %s9 = scalar_lea.sflag [#allocation3], 1
    %10 = vsyncpa %s9, 0
    %11 = vsyncpa [#allocation4], 0
    %s12 = scalar_lea.sflag [#allocation4], 1
    %13 = vsyncpa %s12, 0
    loop: start=0, step=1, limit=4
    $region2: #{tpu_custom_call.1} parent=1 // loop_pre_header
      _
    $region3: #{tpu_custom_call.1} parent=1 // loop_header
      %s15 = sphi 0, %s19
      %p16 = scmp.ge.s32.totalorder %s15, 4
      %s23 = sphi 0, %s23
      %s25 = sphi 0, %s23
      %s26 = sphi 0, %s25
      %s40 = sphi 0, %s26
      %s46 = sphi 0, %s48
      %s49 = sphi 0, %s46
      %s50 = sphi 0, %s49
      %s66 = sphi 0, %s50
      %s72 = sphi 0, %s74
      %s75 = sphi 0, %s72
      %s76 = sphi 0, %s75
      %s92 = sphi 0, %s76
    $region4: #{tpu_custom_call.1} parent=1 // loop_header_branch
      %18 = sbr.rel (%p16) target = $region8
    $region5: #{tpu_custom_call.1} parent=1 // loop_body
      %s20 = ssub.s32 %s15, 1
      %s21 = ssub.s32 %s15, 2
      %s22 = sadd.s32 %s15, 1
      %s24 = sadd.s32 %s23, 1
      %p27 = scmp.eq.s32.totalorder %s15, 1
      %p28 = scmp.ne.s32.totalorder %s23, %s25
      %p29 = scmp.eq.s32.totalorder %s15, 0
      %p30 = por %p28, %p29
      %p31 = scmp.ne.s32.totalorder %s23, %s25
      %p32 = scmp.eq.s32.totalorder %s20, 1
      %p33 = por %p31, %p32
      %p34 = scmp.ne.s32.totalorder %s25, %s26
      %p35 = scmp.eq.s32.totalorder %s20, 0
      %p36 = por %p34, %p35
      %p37 = scmp.ne.s32.totalorder %s25, %s26
      %p38 = scmp.eq.s32.totalorder %s21, 1
      %p39 = por %p37, %p38
      %p41 = scmp.ne.s32.totalorder %s26, %s40
      %p42 = scmp.eq.s32.totalorder %s21, 0
      %p43 = por %p41, %p42
      %s44 = ssub.s32 %s15, %s22
      %p45 = scmp.eq.s32.totalorder %s44, 0
      %s47 = sadd.s32 %s46, 1
      %s48 = scalar_select %p45, %s46, %s47
      %p51 = pneg %p45
      %p52 = scmp.eq.s32.totalorder %s15, 1
      %p53 = por %p51, %p52
      %p54 = scmp.ne.s32.totalorder %s46, %s49
      %p55 = scmp.eq.s32.totalorder %s15, 0
      %p56 = por %p54, %p55
      %p57 = scmp.ne.s32.totalorder %s46, %s49
      %p58 = scmp.eq.s32.totalorder %s20, 1
      %p59 = por %p57, %p58
      %p60 = scmp.ne.s32.totalorder %s49, %s50
      %p61 = scmp.eq.s32.totalorder %s20, 0
      %p62 = por %p60, %p61
      %p63 = scmp.ne.s32.totalorder %s49, %s50
      %p64 = scmp.eq.s32.totalorder %s21, 1
      %p65 = por %p63, %p64
      %p67 = scmp.ne.s32.totalorder %s50, %s66
      %p68 = scmp.eq.s32.totalorder %s21, 0
      %p69 = por %p67, %p68
      %s70 = ssub.s32 %s15, %s22
      %p71 = scmp.eq.s32.totalorder %s70, 0
      %s73 = sadd.s32 %s72, 1
      %s74 = scalar_select %p71, %s72, %s73
      %p77 = pneg %p71
      %p78 = scmp.eq.s32.totalorder %s15, 1
      %p79 = por %p77, %p78
      %p80 = scmp.ne.s32.totalorder %s72, %s75
      %p81 = scmp.eq.s32.totalorder %s15, 0
      %p82 = por %p80, %p81
      %p83 = scmp.ne.s32.totalorder %s72, %s75
      %p84 = scmp.eq.s32.totalorder %s20, 1
      %p85 = por %p83, %p84
      %p86 = scmp.ne.s32.totalorder %s75, %s76
      %p87 = scmp.eq.s32.totalorder %s20, 0
      %p88 = por %p86, %p87
      %p89 = scmp.ne.s32.totalorder %s75, %s76
      %p90 = scmp.eq.s32.totalorder %s21, 1
      %p91 = por %p89, %p90
      %p93 = scmp.ne.s32.totalorder %s76, %s92
      %p94 = scmp.eq.s32.totalorder %s21, 0
      %p95 = por %p93, %p94
      %p96 = scmp.le.s32.totalorder 1, %s15
      %p97 = scmp.lt.s32.totalorder %s15, 3
      %p98 = pnand %p96, %p97
      %p99 = pneg %p98
      // Predicated region
      $region9: #{tpu_custom_call.1} parent=5 // pred_check
        _
      $region10: #{tpu_custom_call.1} parent=5 // pred_check_branch
        %101 = sbr.rel (%p98) target = $region12
      $region11: #{tpu_custom_call.1} parent=5 // pred_region
        %s102 = ssub.s32 %s15, 1
        // Predicated region
        $region13: #{tpu_custom_call.1} parent=11 // pred_check
          %p103 = pneg %p36
        $region14: #{tpu_custom_call.1} parent=11 // pred_check_branch
          %105 = sbr.rel (%p103) target = $region16
        $region15: #{tpu_custom_call.1} parent=11 // pred_region
          %s107 = ssub.s32 16, 16
          %108 = vsyncadd [#allocation5], %s107
          %111 = dma.hbm_to_smem %s0, 16, [#allocation2], [#allocation5]
        $region16: #{tpu_custom_call.1} parent=11 // pred_fallthru
          _
      $region12: #{tpu_custom_call.1} parent=5 // pred_fallthru
        _
      %p112 = scmp.lt.s32.totalorder %s15, 2
      // Predicated region
      $region17: #{tpu_custom_call.1} parent=5 // pred_check
        %p113 = pneg %p112
      $region18: #{tpu_custom_call.1} parent=5 // pred_check_branch
        %115 = sbr.rel (%p113) target = $region20
      $region19: #{tpu_custom_call.1} parent=5 // pred_region
        // Predicated region
        $region21: #{tpu_custom_call.1} parent=19 // pred_check
          %p116 = pneg %p56
        $region22: #{tpu_custom_call.1} parent=19 // pred_check_branch
          %118 = sbr.rel (%p116) target = $region24
        $region23: #{tpu_custom_call.1} parent=19 // pred_region
          %s119 = sand.u32 %s46, 1
          %s120 = scalar_lea.sflag [#allocation3], %s119
          %s121 = sand.u32 %s46, 1
          %s122 = smul.addr %s121, 8
          %s123 = scalar_lea.vmem [#allocation6], %s122
          %s125 = ssub.s32 128, 128
          %126 = vsyncadd %s120, %s125
          %s127 = smul.addr %s15, 128
          %s128 = scalar_lea.hbm %s1, %s127
          %s130 = sshll.u32 %s123, 4
          %s131 = int_to_ptr.vmem [resolvable:$true] %s130
          %133 = dma.hbm_to_vmem [thread:$0]  %s128, 128, %s131, %s120
        $region24: #{tpu_custom_call.1} parent=19 // pred_fallthru
          _
      $region20: #{tpu_custom_call.1} parent=5 // pred_fallthru
        _
      %p134 = scmp.le.s32.totalorder 1, %s15
      %p135 = scmp.lt.s32.totalorder %s15, 3
      %p136 = pnand %p134, %p135
      %p137 = pneg %p136
      // Predicated region
      $region25: #{tpu_custom_call.1} parent=5 // pred_check
        _
      $region26: #{tpu_custom_call.1} parent=5 // pred_check_branch
        %139 = sbr.rel (%p136) target = $region28
      $region27: #{tpu_custom_call.1} parent=5 // pred_region
        %s140 = ssub.s32 %s15, 1
        // Predicated region
        $region29: #{tpu_custom_call.1} parent=27 // pred_check
          %p141 = pneg %p36
        $region30: #{tpu_custom_call.1} parent=27 // pred_check_branch
          %143 = sbr.rel (%p141) target = $region32
        $region31: #{tpu_custom_call.1} parent=27 // pred_region
          %144 = dma.done [#allocation5], 16
        $region32: #{tpu_custom_call.1} parent=27 // pred_fallthru
          _
        %s145 = sand.u32 %s49, 1
        %s146 = scalar_lea.sflag [#allocation3], %s145
        %s147 = sand.u32 %s49, 1
        %s148 = smul.addr %s147, 8
        %s149 = scalar_lea.vmem [#allocation6], %s148
        // Predicated region
        $region33: #{tpu_custom_call.1} parent=27 // pred_check
          %p150 = pneg %p62
        $region34: #{tpu_custom_call.1} parent=27 // pred_check_branch
          %152 = sbr.rel (%p150) target = $region36
        $region35: #{tpu_custom_call.1} parent=27 // pred_region
          %153 = dma.done %s146, 128
        $region36: #{tpu_custom_call.1} parent=27 // pred_fallthru
          _
        %154 = sfence
        %p155 = pneg %p36
        %p156 = pneg %p33
        %s157 = sand.u32 %s49, 1
        %s158 = scalar_lea.sflag [#allocation3], %s157
        %s159 = sand.u32 %s49, 1
        %s160 = smul.addr %s159, 8
        %s161 = scalar_lea.vmem [#allocation6], %s160
        %p162 = pneg %p62
        %p163 = pneg %p59
        %p164 = pneg %p88
        %p165 = pneg %p85
        %s166 = sand.u32 %s75, 1
        %s167 = scalar_lea.sflag [#allocation4], %s166
        %s168 = sand.u32 %s75, 1
        %s169 = smul.addr %s168, 8
        %s170 = scalar_lea.vmem [#allocation7], %s169
        %s171 = sld [smem:[#allocation2]]
        %s172 = sld [smem:[#allocation2 + $0x1]]
        %v173 = vld [vmem:[%s149] sm:$0xff]
        %v174 = vmul.f32 %v173, 0.5
        %v175 = vtanh.pop %v174
        %v176 = vstv %s171
        %v177 = vmul.f32 %v176, %v175
        %v178 = vstv %s172
        %v179 = vadd.f32 %v177, %v178
        %180 = vst [vmem:[%s170] sm:$0xff] %v179
        %s181 = sand.u32 %s75, 1
        %s182 = scalar_lea.sflag [#allocation4], %s181
        %s183 = sand.u32 %s75, 1
        %s184 = smul.addr %s183, 8
        %s185 = scalar_lea.vmem [#allocation7], %s184
        // Predicated region
        $region37: #{tpu_custom_call.1} parent=27 // pred_check
          %p186 = pneg %p85
        $region38: #{tpu_custom_call.1} parent=27 // pred_check_branch
          %188 = sbr.rel (%p186) target = $region40
        $region39: #{tpu_custom_call.1} parent=27 // pred_region
          %s190 = ssub.s32 128, 128
          %191 = vsyncadd %s182, %s190
          %s192 = smul.addr %s20, 128
          %s193 = scalar_lea.hbm %s2, %s192
          %s195 = sshll.u32 %s185, 4
          %s196 = int_to_ptr.vmem [resolvable:$true] %s195
          %198 = dma.vmem_to_hbm [thread:$0]  %s196, 128, %s193, %s182
        $region40: #{tpu_custom_call.1} parent=27 // pred_fallthru
          _
      $region28: #{tpu_custom_call.1} parent=5 // pred_fallthru
        _
      %p199 = scmp.le.s32.totalorder 2, %s15
      // Predicated region
      $region41: #{tpu_custom_call.1} parent=5 // pred_check
        %p200 = pneg %p199
      $region42: #{tpu_custom_call.1} parent=5 // pred_check_branch
        %202 = sbr.rel (%p200) target = $region44
      $region43: #{tpu_custom_call.1} parent=5 // pred_region
        %s203 = ssub.s32 %s15, 2
        // Predicated region
        $region45: #{tpu_custom_call.1} parent=43 // pred_check
          %p204 = pneg %p91
        $region46: #{tpu_custom_call.1} parent=43 // pred_check_branch
          %206 = sbr.rel (%p204) target = $region48
        $region47: #{tpu_custom_call.1} parent=43 // pred_region
          %s207 = sand.u32 %s76, 1
          %s208 = scalar_lea.sflag [#allocation4], %s207
          %s209 = sand.u32 %s76, 1
          %s210 = smul.addr %s209, 8
          %s211 = scalar_lea.vmem [#allocation7], %s210
          %212 = dma.done %s208, 128
        $region48: #{tpu_custom_call.1} parent=43 // pred_fallthru
          _
      $region44: #{tpu_custom_call.1} parent=5 // pred_fallthru
        _
    $region6: #{tpu_custom_call.1} parent=1 // loop_footer
      %s19 = sadd.s32 1, %s15
    $region7: #{tpu_custom_call.1} parent=1 // loop_footer_branch
      %14 = sbr.rel target = $region3
    $region8: #{tpu_custom_call.1} parent=1 // loop_exit
      _
    %213 = vsyncpa [#allocation3], 1
    %s214 = scalar_lea.sflag [#allocation3], 1
    %215 = vsyncpa %s214, 1
    %216 = vsyncpa [#allocation4], 1
    %s217 = scalar_lea.sflag [#allocation4], 1
    %218 = vsyncpa %s217, 1
    %219 = vsyncpa [#allocation5], 1
    %s220 = scalar_lea.sflag [#allocation5], 1
    %221 = vsyncpa %s220, 1

</llo_original>
